<compile_context>
chip_gen: v6e
topology: v6e:2x2x1
jax: 0.10.0
libtpu: 0.0.40
codegen_flags: <defaults>
</compile_context>

<pallas_src>
import functools

import jax
import jax.numpy as jnp
from jax.experimental import pallas as pl
from jax.experimental.pallas import tpu as pltpu

_NEG = -1e30  # effective -inf for masking the value row out of the softmax


def _a3c_kernel(x_ref, w1_ref, wf_ref, bf_ref, out_ref, *, action_dim):
    # x_ref  : [KP, TB]  bf16  rows 0..input_dim-1 = features, row input_dim = 1.0
    # w1_ref : [128, KP] bf16  fc1 weight with b1 folded into the ones-row column
    # wf_ref : [HP, 128] bf16  rows 0..action_dim-1 = policy W, row action_dim = value W
    # bf_ref : [HP, 1]   f32   fused policy/value bias
    # out_ref: [HP, TB]  f32   rows 0..action_dim-1 = probs, row action_dim = value
    h = jnp.dot(w1_ref[...], x_ref[...], preferred_element_type=jnp.float32)
    h = jnp.maximum(h, 0.0)                                   # ReLU in f32 (VPU)

    z = jnp.dot(wf_ref[...], h.astype(jnp.bfloat16),
                preferred_element_type=jnp.float32) + bf_ref[...]

    head = jax.lax.broadcasted_iota(jnp.int32, z.shape, 0)
    logits = jnp.where(head < action_dim, z, _NEG)            # mask the value row
    m = jnp.max(logits, axis=0, keepdims=True)
    e = jnp.exp(logits - m)                                   # masked row -> 0
    inv = 1.0 / jnp.sum(e, axis=0, keepdims=True)             # exact: rows sum to 1
    out_ref[...] = jnp.where(head == action_dim, z, e * inv)


def a3c_chunk_selector(x, w1, b1, wp, bp, wv, bv, *, tb_cap=8192):
    """x: [B, input_dim] f32; weights in PyTorch layout [out, in], biases [out].

    Returns (probs [B, action_dim], value [B, 1])."""
    x = x.astype(jnp.float32)
    B, input_dim = x.shape
    hidden = w1.shape[0]
    action_dim = wp.shape[0]

    KP = input_dim + 1   # features + ones-row (bias fold) -> 4 for the default module
    HP = action_dim + 1  # policy rows + value row         -> 5 for the default module
    assert hidden % 128 == 0

    # Lane-dense batch tiling: TB multiple of 128.  Keep >= 2 tiles when the
    # batch allows it so the "parallel" grid axis can feed both v7x TensorCores.
    b_aligned = pl.cdiv(B, 128) * 128
    TB = min(tb_cap, b_aligned)
    if b_aligned >= 256:
        TB = min(TB, max(128, (b_aligned // 2) // 128 * 128))
    Bpad = pl.cdiv(B, TB) * TB
    grid = (Bpad // TB,)

    # Transposed, padded activations (bf16, batch on the lane axis).
    xt = jnp.zeros((KP, Bpad), jnp.bfloat16)
    xt = xt.at[:input_dim, :B].set(x.T.astype(jnp.bfloat16))
    xt = xt.at[input_dim, :B].set(1.0)  # ones-row -> folds b1 into w1

    # fc1 weight with bias folded in (bf16 MXU operand).
    w1p = jnp.zeros((hidden, KP), jnp.float32)
    w1p = w1p.at[:, :input_dim].set(w1.astype(jnp.float32))
    w1p = w1p.at[:, input_dim].set(b1.astype(jnp.float32))
    w1p = w1p.astype(jnp.bfloat16)

    # Fused policy + value head (bf16 MXU operand); fused bias stays f32.
    wf = jnp.zeros((HP, hidden), jnp.float32)
    wf = wf.at[:action_dim].set(wp.astype(jnp.float32))
    wf = wf.at[action_dim].set(wv.reshape(hidden).astype(jnp.float32))
    wf = wf.astype(jnp.bfloat16)
    bf = jnp.zeros((HP, 1), jnp.float32)
    bf = bf.at[:action_dim, 0].set(bp.astype(jnp.float32))
    bf = bf.at[action_dim, 0].set(bv.reshape(()).astype(jnp.float32))

    kernel = functools.partial(_a3c_kernel, action_dim=action_dim)

    cost = pl.CostEstimate(
        flops=2 * Bpad * hidden * (KP + HP),
        transcendentals=Bpad * HP,
        bytes_accessed=(2 * KP * Bpad + 4 * HP * Bpad
                        + 2 * hidden * KP + 2 * HP * hidden + 4 * HP),
    )

    out = pl.pallas_call(
        kernel,
        out_shape=jax.ShapeDtypeStruct((HP, Bpad), jnp.float32),
        grid_spec=pltpu.PrefetchScalarGridSpec(
            num_scalar_prefetch=0,
            grid=grid,
            in_specs=[
                pl.BlockSpec((KP, TB), lambda i: (0, i)),      # x tile (lane-dense)
                pl.BlockSpec((hidden, KP), lambda i: (0, 0)),  # weights stay VMEM-resident
                pl.BlockSpec((HP, hidden), lambda i: (0, 0)),
                pl.BlockSpec((HP, 1), lambda i: (0, 0)),
            ],
            out_specs=pl.BlockSpec((HP, TB), lambda i: (0, i)),
        ),
        compiler_params=pltpu.CompilerParams(
            dimension_semantics=("parallel",)),  # batch tiles independent -> megacore
        cost_estimate=cost,
    )(xt, w1p, wf, bf)

    # TODO(synk): at large B a downstream consumer could take the [HP, B] slab
    # directly and skip this transpose (it is an extra HBM pass outside the kernel).
    probs = out[:action_dim, :B].T
    value = out[action_dim:action_dim + 1, :B].T
    return probs, value


def init_params(key, input_dim=3, hidden=128, action_dim=4):
    """PyTorch nn.Linear-style init: W [out, in], b [out], U[-1/sqrt(fan_in), ...]."""
    k1, k2, k3, k4, k5, k6 = jax.random.split(key, 6)

    def lin(kw, kb, fan_in, fan_out):
        bound = 1.0 / (fan_in ** 0.5)
        w = jax.random.uniform(kw, (fan_out, fan_in), jnp.float32, -bound, bound)
        b = jax.random.uniform(kb, (fan_out,), jnp.float32, -bound, bound)
        return w, b

    w1, b1 = lin(k1, k2, input_dim, hidden)
    wp, bp = lin(k3, k4, hidden, action_dim)
    wv, bv = lin(k5, k6, hidden, 1)
    return w1, b1, wp, bp, wv, bv


def reference(x, w1, b1, wp, bp, wv, bv):
    h = jnp.maximum(x @ w1.T + b1, 0.0)
    probs = jax.nn.softmax(h @ wp.T + bp, axis=-1)
    value = h @ wv.T + bv
    return probs, value


if __name__ == "__main__":
    key = jax.random.PRNGKey(0)
    kx, kp = jax.random.split(key)

    B, input_dim, action_dim = 2, 3, 4
    x = jax.random.normal(kx, (B, input_dim), jnp.float32)
    params = init_params(kp, input_dim=input_dim, hidden=128, action_dim=action_dim)

    probs, value = a3c_chunk_selector(x, *params)
    jax.block_until_ready((probs, value))

    probs_ref, value_ref = reference(x, *params)
    assert probs.shape == (B, action_dim) and value.shape == (B, 1)
    # bf16 MXU operands (f32 accumulation) -> relaxed tolerance vs. the f32 reference.
    assert jnp.allclose(probs, probs_ref, atol=1e-2, rtol=1e-2)
    assert jnp.allclose(value, value_ref, atol=1e-2, rtol=1e-2)
    # Exact reciprocal in the softmax -> rows sum to 1 to f32 precision.
    assert jnp.allclose(jnp.sum(probs, axis=-1), 1.0, atol=1e-3)

    print("KERNEL_OK")
</pallas_src>

<mosaic_0001>
module attributes {stable_mosaic.version = 11 : i64} {
  func.func @_a3c_kernel(%arg0: i32, %arg1: memref<4x128xbf16, #tpu.memory_space<vmem>>, %arg2: memref<128x4xbf16, #tpu.memory_space<vmem>>, %arg3: memref<5x128xbf16, #tpu.memory_space<vmem>>, %arg4: memref<5x1xf32, #tpu.memory_space<vmem>>, %arg5: memref<5x128xf32, #tpu.memory_space<vmem>>) attributes {dimension_semantics = [#tpu.dimension_semantics<parallel>], iteration_bounds = array<i64: 1>, scalar_prefetch = 0 : i64, scratch_operands = 0 : i64, tpu.core_type = #tpu.core_type<tc>, window_params = [{transform_indices = @transform_0, window_bounds = array<i64: 4, 128>}, {pipeline_mode = #tpu.pipeline_mode<synchronous>, transform_indices = @transform_1, window_bounds = array<i64: 128, 4>}, {pipeline_mode = #tpu.pipeline_mode<synchronous>, transform_indices = @transform_2, window_bounds = array<i64: 5, 128>}, {pipeline_mode = #tpu.pipeline_mode<synchronous>, transform_indices = @transform_3, window_bounds = array<i64: 5, 1>}, {transform_indices = @transform_4, window_bounds = array<i64: 5, 128>}]} {
    %c0 = arith.constant 0 : index
    %c0_0 = arith.constant 0 : index
    %0 = vector.load %arg2[%c0, %c0_0] : memref<128x4xbf16, #tpu.memory_space<vmem>>, vector<128x4xbf16>
    %c0_1 = arith.constant 0 : index
    %c0_2 = arith.constant 0 : index
    %1 = vector.load %arg1[%c0_1, %c0_2] : memref<4x128xbf16, #tpu.memory_space<vmem>>, vector<4x128xbf16>
    %cst = arith.constant dense<0.000000e+00> : vector<128x128xf32>
    %2 = tpu.matmul %0, %1, %cst {dimension_numbers = #tpu.dot_dimension_numbers<[1], [0], [0], [1], [0, 0, 1, 1], [], []>} : vector<128x4xbf16>, vector<4x128xbf16>, vector<128x128xf32> -> vector<128x128xf32>
    %cst_3 = arith.constant 0.000000e+00 : f32
    %3 = vector.broadcast %cst_3 : f32 to vector<128x128xf32>
    %4 = arith.maximumf %2, %3 : vector<128x128xf32>
    %c0_4 = arith.constant 0 : index
    %c0_5 = arith.constant 0 : index
    %5 = vector.load %arg3[%c0_4, %c0_5] : memref<5x128xbf16, #tpu.memory_space<vmem>>, vector<5x128xbf16>
    %6 = arith.truncf %4 : vector<128x128xf32> to vector<128x128xbf16>
    %cst_6 = arith.constant dense<0.000000e+00> : vector<5x128xf32>
    %7 = tpu.matmul %5, %6, %cst_6 {dimension_numbers = #tpu.dot_dimension_numbers<[1], [0], [0], [1], [0, 0, 1, 1], [], []>} : vector<5x128xbf16>, vector<128x128xbf16>, vector<5x128xf32> -> vector<5x128xf32>
    %c0_7 = arith.constant 0 : index
    %c0_8 = arith.constant 0 : index
    %8 = vector.load %arg4[%c0_7, %c0_8] : memref<5x1xf32, #tpu.memory_space<vmem>>, vector<5x1xf32>
    %9 = vector.broadcast %8 : vector<5x1xf32> to vector<5x128xf32>
    %10 = arith.addf %7, %9 : vector<5x128xf32>
    %11 = tpu.iota {dimensions = array<i32: 0>} : vector<5x128xi32>
    %c4_i32 = arith.constant 4 : i32
    %12 = vector.broadcast %c4_i32 : i32 to vector<5x128xi32>
    %13 = arith.cmpi slt, %11, %12 : vector<5x128xi32>
    %cst_9 = arith.constant -1.000000e+30 : f32
    %14 = vector.broadcast %cst_9 : f32 to vector<5x128xf32>
    %15 = arith.select %13, %10, %14 : vector<5x128xi1>, vector<5x128xf32>
    %cst_10 = arith.constant dense<0xFF800000> : vector<128xf32>
    %16 = vector.multi_reduction <maximumf>, %15, %cst_10 [0] : vector<5x128xf32> to vector<128xf32>
    %17 = vector.shape_cast %16 : vector<128xf32> to vector<1x128xf32>
    %18 = vector.broadcast %17 : vector<1x128xf32> to vector<5x128xf32>
    %19 = arith.subf %15, %18 : vector<5x128xf32>
    %20 = math.exp %19 : vector<5x128xf32>
    %cst_11 = arith.constant dense<0.000000e+00> : vector<128xf32>
    %21 = vector.multi_reduction <add>, %20, %cst_11 [0] : vector<5x128xf32> to vector<128xf32>
    %22 = vector.shape_cast %21 : vector<128xf32> to vector<1x128xf32>
    %cst_12 = arith.constant 1.000000e+00 : f32
    %23 = vector.broadcast %cst_12 : f32 to vector<1x128xf32>
    %24 = arith.divf %23, %22 : vector<1x128xf32>
    %c4_i32_13 = arith.constant 4 : i32
    %25 = vector.broadcast %c4_i32_13 : i32 to vector<5x128xi32>
    %26 = arith.cmpi eq, %11, %25 : vector<5x128xi32>
    %27 = vector.broadcast %24 : vector<1x128xf32> to vector<5x128xf32>
    %28 = arith.mulf %20, %27 : vector<5x128xf32>
    %29 = arith.select %26, %10, %28 : vector<5x128xi1>, vector<5x128xf32>
    %c0_14 = arith.constant 0 : index
    %c0_15 = arith.constant 0 : index
    %30 = vector.load %arg5[%c0_14, %c0_15] : memref<5x128xf32, #tpu.memory_space<vmem>>, vector<5x128xf32>
    tpu.vector_store %arg5[%c0_14, %c0_15], %29 {strides = array<i32>} : memref<5x128xf32, #tpu.memory_space<vmem>>, vector<5x128xf32>,
    return
  }
  func.func @transform_0(%arg0: i32) -> (i32, i32) {
    %c0_i32 = arith.constant 0 : i32
    %c0_i32_0 = arith.constant 0 : i32
    return %c0_i32, %arg0 : i32, i32
  }
  func.func @transform_1(%arg0: i32) -> (i32, i32) {
    %c0_i32 = arith.constant 0 : i32
    %c0_i32_0 = arith.constant 0 : i32
    %c0_i32_1 = arith.constant 0 : i32
    return %c0_i32, %c0_i32_0 : i32, i32
  }
  func.func @transform_2(%arg0: i32) -> (i32, i32) {
    %c0_i32 = arith.constant 0 : i32
    %c0_i32_0 = arith.constant 0 : i32
    %c0_i32_1 = arith.constant 0 : i32
    return %c0_i32, %c0_i32_0 : i32, i32
  }
  func.func @transform_3(%arg0: i32) -> (i32, i32) {
    %c0_i32 = arith.constant 0 : i32
    %c0_i32_0 = arith.constant 0 : i32
    %c0_i32_1 = arith.constant 0 : i32
    return %c0_i32, %c0_i32_0 : i32, i32
  }
  func.func @transform_4(%arg0: i32) -> (i32, i32) {
    %c0_i32 = arith.constant 0 : i32
    %c0_i32_0 = arith.constant 0 : i32
    return %c0_i32, %arg0 : i32, i32
  }
}

</mosaic_0001>

<llo_original>
// kernel: tpu_custom_call.1
$region0: #{tpu_custom_call.1}
  #allocation0 [shape = 'u32[]', space=smem, size = 0x4, offset = 0x4, fixed_abs, tag = 'smem constant byte address 0x4 - core index']
  #allocation1 [shape = 'u32[144,128]{1,0:T(1,128)}', space=vmem, size = 0x12000, scoped, tag = 'internal scratch']
  %s0 = inlined_call_operand.vmem [shape: bf16[4,128], index: 0, kind: input, shape index: {}]
  %s1 = inlined_call_operand.vmem [shape: bf16[128,4], index: 1, kind: input, shape index: {}]
  %s2 = inlined_call_operand.vmem [shape: bf16[5,128], index: 2, kind: input, shape index: {}]
  %s3 = inlined_call_operand.vmem [shape: f32[5,1], index: 3, kind: input, shape index: {}]
  %s4 = inlined_call_operand.hbm [shape: f32[5,128], index: 4, kind: output, shape index: {}]
  %s5 = sld [smem:[#allocation0]]
  $region26: #{tpu_custom_call.1} parent=0
    _
  %s7 = ssub.s32 1, %s5
  %s8 = scalar_select 0, %s7, %s5
  $region1: #{tpu_custom_call.1} parent=0
    #allocation2 [shape = 'u8[4096]{0}', space=vmem, size = 0x1000, scoped, tag = 'output window, operand 0, single buffered']
    #allocation3 [shape = 's32[1]{0}', space=sflag, size = 0x4, scoped, tag = 'scoped memory for tpu_custom_call.1']
    %9 = vsyncpa [#allocation3], 0
    // Predicated region
    $region2: #{tpu_custom_call.1} parent=1 // pred_check
      _
    $region3: #{tpu_custom_call.1} parent=1 // pred_check_branch
      %11 = sbr.rel (0) target = $region5
    $region4: #{tpu_custom_call.1} parent=1 // pred_region
      _
    $region5: #{tpu_custom_call.1} parent=1 // pred_fallthru
      _
    // Predicated region
    $region6: #{tpu_custom_call.1} parent=1 // pred_check
      _
    $region7: #{tpu_custom_call.1} parent=1 // pred_check_branch
      %13 = sbr.rel (0) target = $region9
    $region8: #{tpu_custom_call.1} parent=1 // pred_region
      _
    $region9: #{tpu_custom_call.1} parent=1 // pred_fallthru
      _
    // Predicated region
    $region10: #{tpu_custom_call.1} parent=1 // pred_check
      _
    $region11: #{tpu_custom_call.1} parent=1 // pred_check_branch
      %15 = sbr.rel (0) target = $region13
    $region12: #{tpu_custom_call.1} parent=1 // pred_region
      _
    $region13: #{tpu_custom_call.1} parent=1 // pred_fallthru
      _
    // Predicated region
    $region14: #{tpu_custom_call.1} parent=1 // pred_check
      _
    $region15: #{tpu_custom_call.1} parent=1 // pred_check_branch
      %17 = sbr.rel (0) target = $region17
    $region16: #{tpu_custom_call.1} parent=1 // pred_region
      _
    $region17: #{tpu_custom_call.1} parent=1 // pred_fallthru
      _
    %v19 = vld [vmem:[%s1] sm:$0xf]
    %v20 = vld [vmem:[%s1 + $0x4] sm:$0xf]
    %v21 = vld [vmem:[%s1 + $0x8] sm:$0xf]
    %v22 = vld [vmem:[%s1 + $0xc] sm:$0xf]
    %v23 = vld [vmem:[%s1 + $0x10] sm:$0xf]
    %v24 = vld [vmem:[%s1 + $0x14] sm:$0xf]
    %v25 = vld [vmem:[%s1 + $0x18] sm:$0xf]
    %v26 = vld [vmem:[%s1 + $0x1c] sm:$0xf]
    %v27 = vld [vmem:[%s1 + $0x20] sm:$0xf]
    %v28 = vld [vmem:[%s1 + $0x24] sm:$0xf]
    %v29 = vld [vmem:[%s1 + $0x28] sm:$0xf]
    %v30 = vld [vmem:[%s1 + $0x2c] sm:$0xf]
    %v31 = vld [vmem:[%s1 + $0x30] sm:$0xf]
    %v32 = vld [vmem:[%s1 + $0x34] sm:$0xf]
    %v33 = vld [vmem:[%s1 + $0x38] sm:$0xf]
    %v34 = vld [vmem:[%s1 + $0x3c] sm:$0xf]
    %v35 = vld [vmem:[%s0] sm:$0x3]
    %v52 = vunpack.c.l.b16 %v19
    %v53 = vunpack.c.l.b16 %v20
    %v54 = vunpack.c.l.b16 %v21
    %v55 = vunpack.c.l.b16 %v22
    %v56 = vunpack.c.l.b16 %v23
    %v57 = vunpack.c.l.b16 %v24
    %v58 = vunpack.c.l.b16 %v25
    %v59 = vunpack.c.l.b16 %v26
    %v60 = vunpack.c.l.b16 %v27
    %v61 = vunpack.c.l.b16 %v28
    %v62 = vunpack.c.l.b16 %v29
    %v63 = vunpack.c.l.b16 %v30
    %v64 = vunpack.c.l.b16 %v31
    %v65 = vunpack.c.l.b16 %v32
    %v66 = vunpack.c.l.b16 %v33
    %v67 = vunpack.c.l.b16 %v34
    %v68 = vpack.c.b16 %v53, %v52
    %v69 = vpack.c.b16 %v55, %v54
    %v70 = vpack.c.b16 %v57, %v56
    %v71 = vpack.c.b16 %v59, %v58
    %v72 = vpack.c.b16 %v61, %v60
    %v73 = vpack.c.b16 %v63, %v62
    %v74 = vpack.c.b16 %v65, %v64
    %v75 = vpack.c.b16 %v67, %v66
    %vm76 = vcmask 31744
    %v78 = vsel %vm76, %v68, 0
    %v81 = vsel %vm76, %v69, 0
    %v84 = vsel %vm76, %v70, 0
    %v87 = vsel %vm76, %v71, 0
    %v90 = vsel %vm76, %v72, 0
    %v93 = vsel %vm76, %v73, 0
    %v96 = vsel %vm76, %v74, 0
    %v99 = vsel %vm76, %v75, 0
    %vm101 = vcmask 1041408
    %v103 = vsel %vm101, %v35, 0
    %105 = vmatprep.subr.bf16.mxu0 0
    %106 = vmatpush1.bf16.msra.mxu0 0
    %107 = vmatprep.subr.bf16.mxu0 0
    %108 = vmatpush1.bf16.msra.mxu0 0
    %109 = vmatprep.subr.bf16.mxu0 0
    %110 = vmatpush1.bf16.msra.mxu0 0
    %111 = vmatprep.subr.bf16.mxu0 0
    %112 = vmatpush1.bf16.msra.mxu0 0
    %113 = vmatprep.subr.bf16.mxu0 0
    %114 = vmatpush1.bf16.msra.mxu0 0
    %115 = vmatprep.subr.bf16.mxu0 0
    %116 = vmatpush1.bf16.msra.mxu0 0
    %117 = vmatprep.subr.bf16.mxu0 0
    %118 = vmatpush1.bf16.msra.mxu0 0
    %119 = vmatprep.subr.bf16.mxu0 0
    %120 = vmatpush1.bf16.msra.mxu0 %v103
    %121 = vmatprep.subr.bf16.mxu0 0
    %122 = vmatpush2.bf16.msra.mxu0 0
    %123 = vmatprep.subr.bf16.mxu0 0
    %124 = vmatpush2.bf16.msra.mxu0 0
    %125 = vmatprep.subr.bf16.mxu0 0
    %126 = vmatpush2.bf16.msra.mxu0 0
    %127 = vmatprep.subr.bf16.mxu0 0
    %128 = vmatpush2.bf16.msra.mxu0 0
    %129 = vmatprep.subr.bf16.mxu0 0
    %130 = vmatpush2.bf16.msra.mxu0 0
    %131 = vmatprep.subr.bf16.mxu0 0
    %132 = vmatpush2.bf16.msra.mxu0 0
    %133 = vmatprep.subr.bf16.mxu0 0
    %134 = vmatpush2.bf16.msra.mxu0 0
    %135 = vmatprep.subr.bf16.mxu0 0
    %136 = vmatpush2.bf16.msra.mxu0 0
    %137 = vmatprep.mubr.bf16.mxu0 0
    %138 = vmatmul.mubr.bf16.gmra.mxu0 %v78
    %v139 = vpop.f32.mrf.mxu0
    %v140 = vadd.f32 0.0, %v139
    %v141 = vpop.f32.mrf.mxu0
    %v142 = vpop.f32.mrf.mxu0
    %v143 = vadd.f32 0.0, %v142
    %v144 = vpop.f32.mrf.mxu0
    %145 = vmatprep.mubr.bf16.mxu0 0
    %146 = vmatmul.mubr.bf16.gmra.mxu0 %v81
    %v147 = vpop.f32.mrf.mxu0
    %v148 = vadd.f32 0.0, %v147
    %v149 = vpop.f32.mrf.mxu0
    %v150 = vpop.f32.mrf.mxu0
    %v151 = vadd.f32 0.0, %v150
    %v152 = vpop.f32.mrf.mxu0
    %153 = vmatprep.mubr.bf16.mxu0 0
    %154 = vmatmul.mubr.bf16.gmra.mxu0 %v84
    %v155 = vpop.f32.mrf.mxu0
    %v156 = vadd.f32 0.0, %v155
    %v157 = vpop.f32.mrf.mxu0
    %v158 = vpop.f32.mrf.mxu0
    %v159 = vadd.f32 0.0, %v158
    %v160 = vpop.f32.mrf.mxu0
    %161 = vmatprep.mubr.bf16.mxu0 0
    %162 = vmatmul.mubr.bf16.gmra.mxu0 %v87
    %v163 = vpop.f32.mrf.mxu0
    %v164 = vadd.f32 0.0, %v163
    %v165 = vpop.f32.mrf.mxu0
    %v166 = vpop.f32.mrf.mxu0
    %v167 = vadd.f32 0.0, %v166
    %v168 = vpop.f32.mrf.mxu0
    %169 = vmatprep.mubr.bf16.mxu0 0
    %170 = vmatmul.mubr.bf16.gmra.mxu0 %v90
    %v171 = vpop.f32.mrf.mxu0
    %v172 = vadd.f32 0.0, %v171
    %v173 = vpop.f32.mrf.mxu0
    %v174 = vpop.f32.mrf.mxu0
    %v175 = vadd.f32 0.0, %v174
    %v176 = vpop.f32.mrf.mxu0
    %177 = vmatprep.mubr.bf16.mxu0 0
    %178 = vmatmul.mubr.bf16.gmra.mxu0 %v93
    %v179 = vpop.f32.mrf.mxu0
    %v180 = vadd.f32 0.0, %v179
    %v181 = vpop.f32.mrf.mxu0
    %v182 = vpop.f32.mrf.mxu0
    %v183 = vadd.f32 0.0, %v182
    %v184 = vpop.f32.mrf.mxu0
    %185 = vmatprep.mubr.bf16.mxu0 0
    %186 = vmatmul.mubr.bf16.gmra.mxu0 %v96
    %v187 = vpop.f32.mrf.mxu0
    %v188 = vadd.f32 0.0, %v187
    %v189 = vpop.f32.mrf.mxu0
    %v190 = vpop.f32.mrf.mxu0
    %v191 = vadd.f32 0.0, %v190
    %v192 = vpop.f32.mrf.mxu0
    %193 = vmatprep.mubr.bf16.mxu0 0
    %194 = vmatmul.mubr.bf16.gmra.mxu0 %v99
    %v195 = vpop.f32.mrf.mxu0
    %v196 = vadd.f32 0.0, %v195
    %v197 = vpop.f32.mrf.mxu0
    %v198 = vpop.f32.mrf.mxu0
    %v199 = vadd.f32 0.0, %v198
    %v200 = vpop.f32.mrf.mxu0
    %201 = vdwg.mxu0
    %v202 = vmax.f32 %v140, 0.0
    %v203 = vmax.f32 %v143, 0.0
    %v204 = vmax.f32 %v148, 0.0
    %v205 = vmax.f32 %v151, 0.0
    %v206 = vmax.f32 %v156, 0.0
    %v207 = vmax.f32 %v159, 0.0
    %v208 = vmax.f32 %v164, 0.0
    %v209 = vmax.f32 %v167, 0.0
    %v210 = vmax.f32 %v172, 0.0
    %v211 = vmax.f32 %v175, 0.0
    %v212 = vmax.f32 %v180, 0.0
    %v213 = vmax.f32 %v183, 0.0
    %v214 = vmax.f32 %v188, 0.0
    %v215 = vmax.f32 %v191, 0.0
    %v216 = vmax.f32 %v196, 0.0
    %v217 = vmax.f32 %v199, 0.0
    %v218 = vld [vmem:[%s2] sm:$0x7]
    %v219 = vpack.c.bf16 %v203, %v202
    %v220 = vpack.c.bf16 %v205, %v204
    %v221 = vpack.c.bf16 %v207, %v206
    %v222 = vpack.c.bf16 %v209, %v208
    %v223 = vpack.c.bf16 %v211, %v210
    %v224 = vpack.c.bf16 %v213, %v212
    %v225 = vpack.c.bf16 %v215, %v214
    %v226 = vpack.c.bf16 %v217, %v216
    %v227 = vld [vmem:[%s3] sm:$0x1f]
    %229 = vset.pattern.permute.xlu0 0
    %230 = vperm.xlu0 %229, %v227
    %v231 = vpop.permute.xlu0 %230
    %233 = vmatprep.subr.bf16.mxu0 0
    %234 = vmatpush1.bf16.msra.mxu0 %v226
    %235 = vmatprep.subr.bf16.mxu0 0
    %236 = vmatpush1.bf16.msra.mxu0 %v225
    %237 = vmatprep.subr.bf16.mxu0 0
    %238 = vmatpush1.bf16.msra.mxu0 %v224
    %239 = vmatprep.subr.bf16.mxu0 0
    %240 = vmatpush1.bf16.msra.mxu0 %v223
    %241 = vmatprep.subr.bf16.mxu0 0
    %242 = vmatpush1.bf16.msra.mxu0 %v222
    %243 = vmatprep.subr.bf16.mxu0 0
    %244 = vmatpush1.bf16.msra.mxu0 %v221
    %245 = vmatprep.subr.bf16.mxu0 0
    %246 = vmatpush1.bf16.msra.mxu0 %v220
    %247 = vmatprep.subr.bf16.mxu0 0
    %248 = vmatpush1.bf16.msra.mxu0 %v219
    %249 = vmatprep.subr.bf16.mxu0 0
    %250 = vmatpush2.bf16.msra.mxu0 0
    %251 = vmatprep.subr.bf16.mxu0 0
    %252 = vmatpush2.bf16.msra.mxu0 0
    %253 = vmatprep.subr.bf16.mxu0 0
    %254 = vmatpush2.bf16.msra.mxu0 0
    %255 = vmatprep.subr.bf16.mxu0 0
    %256 = vmatpush2.bf16.msra.mxu0 0
    %257 = vmatprep.subr.bf16.mxu0 0
    %258 = vmatpush2.bf16.msra.mxu0 0
    %259 = vmatprep.subr.bf16.mxu0 0
    %260 = vmatpush2.bf16.msra.mxu0 0
    %261 = vmatprep.subr.bf16.mxu0 0
    %262 = vmatpush2.bf16.msra.mxu0 0
    %263 = vmatprep.subr.bf16.mxu0 0
    %264 = vmatpush2.bf16.msra.mxu0 0
    %265 = vmatprep.mubr.bf16.mxu0 0
    %266 = vmatmul.mubr.bf16.gmra.mxu0 %v218
    %v267 = vpop.f32.mrf.mxu0
    %v268 = vadd.f32 %v231, %v267
    %v269 = vpop.f32.mrf.mxu0
    %v270 = vpop.f32.mrf.mxu0
    %v271 = vpop.f32.mrf.mxu0
    %272 = vdwg.mxu0
    %v273 = vlaneseq
    %v274 = vshrl.u32 %v273, 7
    %vm275 = vcmp.lt.s32.totalorder %v274, 4
    %v276 = vsel %vm275, %v268, -1e+30
    %vm277 = vcmask 1044480
    %v278 = vsel %vm277, %v276, -inf
    %v279 = vrot.slane %v278, 4
    %v280 = vmax.f32 %v278, %v279
    %v281 = vrot.slane %v280, 2
    %v282 = vmax.f32 %v280, %v281
    %v283 = vrot.slane %v282, 1
    %v284 = vmax.f32 %v282, %v283
    %v285 = vsub.f32 %v276, %v284
    %v286 = vmul.f32 %v285, 1.442695
    %v287 = vpow.pop %v286
    %v288 = vsel %vm277, %v287, 0.0
    %v289 = vrot.slane %v288, 4
    %v290 = vadd.f32 %v288, %v289
    %v291 = vrot.slane %v290, 2
    %v292 = vadd.f32 %v290, %v291
    %v293 = vrot.slane %v292, 1
    %v294 = vadd.f32 %v292, %v293
    %v295 = vrcp.pop %v294
    %v296 = vmul.f32 1.0, %v295
    %vm297 = vcmp.eq.s32.totalorder %v274, 4
    %v298 = vmul.f32 %v287, %v296
    %v299 = vsel %vm297, %v268, %v298
    %300 = vst [vmem:[#allocation2] sm:$0x1f] %v299
    // Predicated region
    $region18: #{tpu_custom_call.1} parent=1 // pred_check
      _
    $region19: #{tpu_custom_call.1} parent=1 // pred_check_branch
      %302 = sbr.rel (0) target = $region21
    $region20: #{tpu_custom_call.1} parent=1 // pred_region
      %s304 = ssub.s32 128, 128
      %305 = vsyncadd [#allocation3], %s304
      %s307 = sshll.u32 [#allocation2], 4
      %s308 = int_to_ptr.vmem [resolvable:$true] %s307
      %310 = dma.vmem_to_hbm [thread:$0]  %s308, 128, %s4, [#allocation3]
    $region21: #{tpu_custom_call.1} parent=1 // pred_fallthru
      _
    // Predicated region
    $region22: #{tpu_custom_call.1} parent=1 // pred_check
      _
    $region23: #{tpu_custom_call.1} parent=1 // pred_check_branch
      %312 = sbr.rel (0) target = $region25
    $region24: #{tpu_custom_call.1} parent=1 // pred_region
      %313 = dma.done [#allocation3], 128
    $region25: #{tpu_custom_call.1} parent=1 // pred_fallthru
      _
    %314 = vsyncpa [#allocation3], 1

</llo_original>
